<compile_context>
chip_gen: v7x
topology: tpu7x:2x2x1
jax: 0.10.0
libtpu: 0.0.40
codegen_flags: <defaults>
</compile_context>

<pallas_src>
import functools

import numpy as np
import jax
import jax.numpy as jnp
from jax import lax
from jax.experimental import pallas as pl
from jax.experimental.pallas import tpu as pltpu

START_TAG = '<START>'
STOP_TAG = '<STOP>'

LANE = 128          # TPU lane width (tag axis padded to one vreg of lanes)
SUBLANE = 8         # TPU sublane width (tag axis padded to one vreg of sublanes)
NEG = -1e30         # "minus infinity" for padded tag slots (finite -> no nan/inf)
UNROLL_MAX = 128    # fully unroll the time loop up to this many steps


def _even_step(fv_row, feat_row, trans, eye):
    """Row (1,TP) -> column (T_sub,1). prev tag on lanes, next tag on sublanes."""
    # Off-chain: convert the emission row into a column indexed by next tag.
    feat_col = jnp.sum(jnp.where(eye, feat_row, 0.0), axis=-1, keepdims=True)   # (T_sub,1)
    M = fv_row + trans                                        # (T_sub, TP)
    m = jnp.max(M, axis=-1, keepdims=True)                    # (T_sub, 1)
    s = jnp.sum(jnp.exp(M - m), axis=-1, keepdims=True)       # (T_sub, 1)
    return feat_col + m + jnp.log(s)                          # (T_sub, 1)


def _odd_step(fv_col, feat_row, trans_t):
    """Column (T_sub,1) -> row (1,TP). prev tag on sublanes, next tag on lanes."""
    M = fv_col + trans_t                                      # (T_sub, TP)
    m = jnp.max(M, axis=0, keepdims=True)                     # (1, TP)
    s = jnp.sum(jnp.exp(M - m), axis=0, keepdims=True)        # (1, TP)
    return feat_row + m + jnp.log(s)                          # (1, TP)


def _crf_forward_kernel(feats_ref, trans_ref, trans_t_ref, out_ref, *,
                        seq_len, tagset_size, start_idx, stop_idx):
    """feats_ref: (S_pad, 128) f32
       trans_ref: (T_sub, 128) f32   [next tag on sublanes, prev tag on lanes]
       trans_t_ref: (T_sub, 128) f32 [prev tag on sublanes, next tag on lanes]
       out_ref: (1, 1) f32"""
    T_sub, TP = trans_ref.shape

    lane = lax.broadcasted_iota(jnp.int32, (1, TP), 1)
    # init_alphas: -10000 everywhere, 0 at START; padded lanes -> NEG (one-time mask)
    fv = jnp.where(lane == start_idx, 0.0, -10000.0)
    fv = jnp.where(lane < tagset_size, fv, NEG).astype(jnp.float32)     # (1, TP) row

    # Diagonal selector used only for off-chain row->column conversions.
    sub_i = lax.broadcasted_iota(jnp.int32, (T_sub, TP), 0)
    lan_i = lax.broadcasted_iota(jnp.int32, (T_sub, TP), 1)
    eye = sub_i == lan_i

    trans = trans_ref[...]        # (T_sub, TP), NEG-padded
    trans_t = trans_t_ref[...]    # (T_sub, TP), NEG-padded (transposed layout)

    if seq_len <= UNROLL_MAX:
        # Fully unrolled: every feats access has a static sublane offset; the
        # off-chain feat loads/conversions overlap the serial lse chain.
        for t in range(seq_len):
            feat_row = feats_ref[pl.ds(t, 1), :]                         # (1, TP)
            if t % 2 == 0:
                fv = _even_step(fv, feat_row, trans, eye)                # -> column
            else:
                fv = _odd_step(fv, feat_row, trans_t)                    # -> row
    else:
        # Long sequences: loop over timestep pairs so the carried fv keeps a
        # fixed (1, TP) row shape across iterations.
        n_pairs = seq_len // 2

        def pair(p, fv_row):
            t0 = pl.multiple_of(p * 2, 2)
            fv_col = _even_step(fv_row, feats_ref[pl.ds(t0, 1), :], trans, eye)
            return _odd_step(fv_col, feats_ref[pl.ds(t0 + 1, 1), :], trans_t)

        fv = lax.fori_loop(0, n_pairs, pair, fv, unroll=4)
        if seq_len % 2 == 1:
            fv = _even_step(fv, feats_ref[pl.ds(seq_len - 1, 1), :], trans, eye)

    # terminal_var = fv + transitions[STOP, :]; alpha = logsumexp(terminal_var)
    stop_row = trans_ref[pl.ds(stop_idx, 1), :]                          # (1, TP)
    if seq_len % 2 == 0:
        # fv is a row over prev tags (lanes)
        term = fv + stop_row                                             # (1, TP)
        m = jnp.max(term, axis=-1, keepdims=True)
        alpha = m + jnp.log(jnp.sum(jnp.exp(term - m), axis=-1, keepdims=True))
    else:
        # fv is a column over prev tags (sublanes); bring trans[STOP,:] into
        # column form with the (off-chain) diagonal select.
        stop_col = jnp.sum(jnp.where(eye, stop_row, 0.0), axis=-1, keepdims=True)
        term = fv + stop_col                                             # (T_sub, 1)
        m = jnp.max(term, axis=0, keepdims=True)
        alpha = m + jnp.log(jnp.sum(jnp.exp(term - m), axis=0, keepdims=True))
    out_ref[...] = alpha


class CustomCRFPallas:
    """JAX/Pallas port of app.lm_rnn.CustomCRF (forward pass only)."""

    def __init__(self, tag_to_idx, tagset_size, key):
        # The single-vreg layout (and the diagonal row<->column trick) assumes the
        # tag axis fits in one 128-lane vreg.
        assert tagset_size <= LANE, "tagset_size must be <= 128 for this kernel layout"
        self.tag_to_idx = tag_to_idx
        self.tagset_size = tagset_size

        # deterministic synthetic parameter init (same shape/constraints as torch)
        t = jax.random.normal(key, (tagset_size, tagset_size), dtype=jnp.float32)
        t = t.at[tag_to_idx[START_TAG], :].set(-10000.0)
        t = t.at[:, tag_to_idx[STOP_TAG]].set(-10000.0)
        self.transitions = t

        # Precompute BOTH padded transition layouts once (parameters, not data):
        #   trans_p  [next tag on sublanes, prev tag on lanes]
        #   transT_p [prev tag on sublanes, next tag on lanes]
        # Padded entries are NEG so exp(.) underflows to 0 in every logsumexp.
        self._t_sub = SUBLANE * pl.cdiv(tagset_size, SUBLANE)
        self._trans_p = (jnp.full((self._t_sub, LANE), NEG, jnp.float32)
                         .at[:tagset_size, :tagset_size].set(t))
        self._trans_t_p = (jnp.full((self._t_sub, LANE), NEG, jnp.float32)
                           .at[:tagset_size, :tagset_size].set(t.T))

    def _forward_alg(self, feats):
        S, T = feats.shape
        assert T == self.tagset_size
        S_pad = SUBLANE * max(1, pl.cdiv(S, SUBLANE))      # seq axis on sublanes

        feats_p = jnp.zeros((S_pad, LANE), jnp.float32).at[:S, :T].set(feats)

        kernel = functools.partial(
            _crf_forward_kernel,
            seq_len=S,
            tagset_size=T,
            start_idx=self.tag_to_idx[START_TAG],
            stop_idx=self.tag_to_idx[STOP_TAG],
        )
        alpha = pl.pallas_call(
            kernel,
            out_shape=jax.ShapeDtypeStruct((1, 1), jnp.float32),
            grid=(1,),
            in_specs=[
                pl.BlockSpec((S_pad, LANE), lambda i: (0, 0)),
                pl.BlockSpec((self._t_sub, LANE), lambda i: (0, 0)),
                pl.BlockSpec((self._t_sub, LANE), lambda i: (0, 0)),
            ],
            out_specs=pl.BlockSpec((1, 1), lambda i: (0, 0)),
            compiler_params=pltpu.CompilerParams(dimension_semantics=("arbitrary",)),
        )(feats_p, self._trans_p, self._trans_t_p)
        return alpha[0, 0]

    def forward(self, inputs):
        decoded, raw_outputs, outputs = inputs
        alpha = self._forward_alg(decoded)
        # same tuple contract as the torch module's forward
        return (self.transitions, self.tag_to_idx, self.tagset_size,
                decoded, alpha, raw_outputs, outputs)


def crf_forward_ref(feats, transitions, start_idx, stop_idx):
    """NumPy reference reproducing the torch _forward_alg loop exactly."""
    feats = np.asarray(feats, np.float32)
    transitions = np.asarray(transitions, np.float32)
    T = transitions.shape[0]

    def lse(v):
        m = np.max(v)
        return m + np.log(np.sum(np.exp(v - m)))

    fv = np.full((T,), -10000.0, np.float32)
    fv[start_idx] = 0.0
    for feat in feats:
        fv = np.array([lse(fv + transitions[j, :] + feat[j]) for j in range(T)],
                      dtype=np.float32)
    return lse(fv + transitions[stop_idx, :])


if __name__ == "__main__":
    key = jax.random.PRNGKey(0)
    k_param, k_feat, k_raw, k_out = jax.random.split(key, 4)

    tag_to_idx = {'B': 0, 'I': 1, 'O': 2, START_TAG: 3, STOP_TAG: 4}
    tagset_size = len(tag_to_idx)
    seq_len = 8
    hidden = 32

    crf = CustomCRFPallas(tag_to_idx, tagset_size, k_param)

    decoded = jax.random.normal(k_feat, (seq_len, tagset_size), dtype=jnp.float32)
    raw_outputs = jax.random.normal(k_raw, (seq_len, 1, hidden), dtype=jnp.float32)
    outputs = jax.random.normal(k_out, (seq_len, 1, hidden), dtype=jnp.float32)

    result = crf.forward((decoded, raw_outputs, outputs))
    alpha = jax.block_until_ready(result[4])

    ref_alpha = crf_forward_ref(decoded, crf.transitions,
                                tag_to_idx[START_TAG], tag_to_idx[STOP_TAG])
    assert np.allclose(float(alpha), float(ref_alpha), rtol=1e-4, atol=1e-3), \
        (float(alpha), float(ref_alpha))

    # Extra self-checks: odd length (column-terminal path) and a long sequence
    # that exercises the fori_loop pair path.
    for extra_len in (7, 130):
        f = jax.random.normal(jax.random.PRNGKey(extra_len),
                              (extra_len, tagset_size), dtype=jnp.float32)
        a = jax.block_until_ready(crf._forward_alg(f))
        r = crf_forward_ref(f, crf.transitions,
                            tag_to_idx[START_TAG], tag_to_idx[STOP_TAG])
        assert np.allclose(float(a), float(r), rtol=1e-3, atol=1e-2), \
            (extra_len, float(a), float(r))

    print("KERNEL_OK")
</pallas_src>

<mosaic_0001>
module attributes {stable_mosaic.version = 11 : i64} {
  func.func @_crf_forward_kernel(%arg0: i32, %arg1: memref<8x128xf32, #tpu.memory_space<vmem>>, %arg2: memref<8x128xf32, #tpu.memory_space<vmem>>, %arg3: memref<8x128xf32, #tpu.memory_space<vmem>>, %arg4: memref<1x1xf32, #tpu.memory_space<vmem>>) attributes {dimension_semantics = [#tpu.dimension_semantics<arbitrary>], iteration_bounds = array<i64: 1>, scalar_prefetch = 0 : i64, scratch_operands = 0 : i64, tpu.core_type = #tpu.core_type<tc>, window_params = [{pipeline_mode = #tpu.pipeline_mode<synchronous>, transform_indices = @transform_0, window_bounds = array<i64: 8, 128>}, {pipeline_mode = #tpu.pipeline_mode<synchronous>, transform_indices = @transform_1, window_bounds = array<i64: 8, 128>}, {pipeline_mode = #tpu.pipeline_mode<synchronous>, transform_indices = @transform_2, window_bounds = array<i64: 8, 128>}, {pipeline_mode = #tpu.pipeline_mode<synchronous>, transform_indices = @transform_3, window_bounds = array<i64: 1, 1>}]} {
    %0 = tpu.iota {dimensions = array<i32: 1>} : vector<1x128xi32>
    %c3_i32 = arith.constant 3 : i32
    %1 = vector.broadcast %c3_i32 : i32 to vector<1x128xi32>
    %2 = arith.cmpi eq, %0, %1 : vector<1x128xi32>
    %cst = arith.constant 0.000000e+00 : f32
    %cst_0 = arith.constant -1.000000e+04 : f32
    %3 = vector.broadcast %cst : f32 to vector<1x128xf32>
    %4 = vector.broadcast %cst_0 : f32 to vector<1x128xf32>
    %5 = arith.select %2, %3, %4 : vector<1x128xi1>, vector<1x128xf32>
    %c5_i32 = arith.constant 5 : i32
    %6 = vector.broadcast %c5_i32 : i32 to vector<1x128xi32>
    %7 = arith.cmpi slt, %0, %6 : vector<1x128xi32>
    %cst_1 = arith.constant -1.000000e+30 : f32
    %8 = vector.broadcast %cst_1 : f32 to vector<1x128xf32>
    %9 = arith.select %7, %5, %8 : vector<1x128xi1>, vector<1x128xf32>
    %10 = tpu.iota {dimensions = array<i32: 0>} : vector<8x128xi32>
    %11 = tpu.iota {dimensions = array<i32: 1>} : vector<8x128xi32>
    %12 = arith.cmpi eq, %10, %11 : vector<8x128xi32>
    %c0 = arith.constant 0 : index
    %c0_2 = arith.constant 0 : index
    %13 = vector.load %arg2[%c0, %c0_2] : memref<8x128xf32, #tpu.memory_space<vmem>>, vector<8x128xf32>
    %c0_3 = arith.constant 0 : index
    %c0_4 = arith.constant 0 : index
    %14 = vector.load %arg3[%c0_3, %c0_4] : memref<8x128xf32, #tpu.memory_space<vmem>>, vector<8x128xf32>
    %c0_5 = arith.constant 0 : index
    %c0_6 = arith.constant 0 : index
    %15 = vector.load %arg1[%c0_5, %c0_6] : memref<8x128xf32, #tpu.memory_space<vmem>>, vector<1x128xf32>
    %cst_7 = arith.constant 0.000000e+00 : f32
    %16 = vector.shape_cast %15 : vector<1x128xf32> to vector<1x128xf32>
    %17 = vector.broadcast %16 : vector<1x128xf32> to vector<8x128xf32>
    %18 = vector.broadcast %cst_7 : f32 to vector<8x128xf32>
    %19 = arith.select %12, %17, %18 : vector<8x128xi1>, vector<8x128xf32>
    %cst_8 = arith.constant dense<0.000000e+00> : vector<8xf32>
    %20 = vector.multi_reduction <add>, %19, %cst_8 [1] : vector<8x128xf32> to vector<8xf32>
    %21 = vector.shape_cast %20 : vector<8xf32> to vector<8x1xf32>
    %22 = vector.broadcast %9 : vector<1x128xf32> to vector<8x128xf32>
    %23 = arith.addf %22, %13 : vector<8x128xf32>
    %cst_9 = arith.constant dense<0xFF800000> : vector<8xf32>
    %24 = vector.multi_reduction <maximumf>, %23, %cst_9 [1] : vector<8x128xf32> to vector<8xf32>
    %25 = vector.shape_cast %24 : vector<8xf32> to vector<8x1xf32>
    %26 = vector.broadcast %25 : vector<8x1xf32> to vector<8x128xf32>
    %27 = arith.subf %23, %26 : vector<8x128xf32>
    %28 = math.exp %27 : vector<8x128xf32>
    %cst_10 = arith.constant dense<0.000000e+00> : vector<8xf32>
    %29 = vector.multi_reduction <add>, %28, %cst_10 [1] : vector<8x128xf32> to vector<8xf32>
    %30 = vector.shape_cast %29 : vector<8xf32> to vector<8x1xf32>
    %31 = arith.addf %21, %25 : vector<8x1xf32>
    %32 = math.log %30 : vector<8x1xf32>
    %33 = arith.addf %31, %32 : vector<8x1xf32>
    %c1 = arith.constant 1 : index
    %c0_11 = arith.constant 0 : index
    %34 = vector.load %arg1[%c1, %c0_11] : memref<8x128xf32, #tpu.memory_space<vmem>>, vector<1x128xf32>
    %35 = vector.broadcast %33 : vector<8x1xf32> to vector<8x128xf32>
    %36 = arith.addf %35, %14 : vector<8x128xf32>
    %cst_12 = arith.constant dense<0xFF800000> : vector<128xf32>
    %37 = vector.multi_reduction <maximumf>, %36, %cst_12 [0] : vector<8x128xf32> to vector<128xf32>
    %38 = vector.shape_cast %37 : vector<128xf32> to vector<1x128xf32>
    %39 = vector.broadcast %38 : vector<1x128xf32> to vector<8x128xf32>
    %40 = arith.subf %36, %39 : vector<8x128xf32>
    %41 = math.exp %40 : vector<8x128xf32>
    %cst_13 = arith.constant dense<0.000000e+00> : vector<128xf32>
    %42 = vector.multi_reduction <add>, %41, %cst_13 [0] : vector<8x128xf32> to vector<128xf32>
    %43 = vector.shape_cast %42 : vector<128xf32> to vector<1x128xf32>
    %44 = arith.addf %34, %38 : vector<1x128xf32>
    %45 = math.log %43 : vector<1x128xf32>
    %46 = arith.addf %44, %45 : vector<1x128xf32>
    %c2 = arith.constant 2 : index
    %c0_14 = arith.constant 0 : index
    %47 = vector.load %arg1[%c2, %c0_14] : memref<8x128xf32, #tpu.memory_space<vmem>>, vector<1x128xf32>
    %cst_15 = arith.constant 0.000000e+00 : f32
    %48 = vector.shape_cast %47 : vector<1x128xf32> to vector<1x128xf32>
    %49 = vector.broadcast %48 : vector<1x128xf32> to vector<8x128xf32>
    %50 = vector.broadcast %cst_15 : f32 to vector<8x128xf32>
    %51 = arith.select %12, %49, %50 : vector<8x128xi1>, vector<8x128xf32>
    %cst_16 = arith.constant dense<0.000000e+00> : vector<8xf32>
    %52 = vector.multi_reduction <add>, %51, %cst_16 [1] : vector<8x128xf32> to vector<8xf32>
    %53 = vector.shape_cast %52 : vector<8xf32> to vector<8x1xf32>
    %54 = vector.broadcast %46 : vector<1x128xf32> to vector<8x128xf32>
    %55 = arith.addf %54, %13 : vector<8x128xf32>
    %cst_17 = arith.constant dense<0xFF800000> : vector<8xf32>
    %56 = vector.multi_reduction <maximumf>, %55, %cst_17 [1] : vector<8x128xf32> to vector<8xf32>
    %57 = vector.shape_cast %56 : vector<8xf32> to vector<8x1xf32>
    %58 = vector.broadcast %57 : vector<8x1xf32> to vector<8x128xf32>
    %59 = arith.subf %55, %58 : vector<8x128xf32>
    %60 = math.exp %59 : vector<8x128xf32>
    %cst_18 = arith.constant dense<0.000000e+00> : vector<8xf32>
    %61 = vector.multi_reduction <add>, %60, %cst_18 [1] : vector<8x128xf32> to vector<8xf32>
    %62 = vector.shape_cast %61 : vector<8xf32> to vector<8x1xf32>
    %63 = arith.addf %53, %57 : vector<8x1xf32>
    %64 = math.log %62 : vector<8x1xf32>
    %65 = arith.addf %63, %64 : vector<8x1xf32>
    %c3 = arith.constant 3 : index
    %c0_19 = arith.constant 0 : index
    %66 = vector.load %arg1[%c3, %c0_19] : memref<8x128xf32, #tpu.memory_space<vmem>>, vector<1x128xf32>
    %67 = vector.broadcast %65 : vector<8x1xf32> to vector<8x128xf32>
    %68 = arith.addf %67, %14 : vector<8x128xf32>
    %cst_20 = arith.constant dense<0xFF800000> : vector<128xf32>
    %69 = vector.multi_reduction <maximumf>, %68, %cst_20 [0] : vector<8x128xf32> to vector<128xf32>
    %70 = vector.shape_cast %69 : vector<128xf32> to vector<1x128xf32>
    %71 = vector.broadcast %70 : vector<1x128xf32> to vector<8x128xf32>
    %72 = arith.subf %68, %71 : vector<8x128xf32>
    %73 = math.exp %72 : vector<8x128xf32>
    %cst_21 = arith.constant dense<0.000000e+00> : vector<128xf32>
    %74 = vector.multi_reduction <add>, %73, %cst_21 [0] : vector<8x128xf32> to vector<128xf32>
    %75 = vector.shape_cast %74 : vector<128xf32> to vector<1x128xf32>
    %76 = arith.addf %66, %70 : vector<1x128xf32>
    %77 = math.log %75 : vector<1x128xf32>
    %78 = arith.addf %76, %77 : vector<1x128xf32>
    %c4 = arith.constant 4 : index
    %c0_22 = arith.constant 0 : index
    %79 = vector.load %arg1[%c4, %c0_22] : memref<8x128xf32, #tpu.memory_space<vmem>>, vector<1x128xf32>
    %cst_23 = arith.constant 0.000000e+00 : f32
    %80 = vector.shape_cast %79 : vector<1x128xf32> to vector<1x128xf32>
    %81 = vector.broadcast %80 : vector<1x128xf32> to vector<8x128xf32>
    %82 = vector.broadcast %cst_23 : f32 to vector<8x128xf32>
    %83 = arith.select %12, %81, %82 : vector<8x128xi1>, vector<8x128xf32>
    %cst_24 = arith.constant dense<0.000000e+00> : vector<8xf32>
    %84 = vector.multi_reduction <add>, %83, %cst_24 [1] : vector<8x128xf32> to vector<8xf32>
    %85 = vector.shape_cast %84 : vector<8xf32> to vector<8x1xf32>
    %86 = vector.broadcast %78 : vector<1x128xf32> to vector<8x128xf32>
    %87 = arith.addf %86, %13 : vector<8x128xf32>
    %cst_25 = arith.constant dense<0xFF800000> : vector<8xf32>
    %88 = vector.multi_reduction <maximumf>, %87, %cst_25 [1] : vector<8x128xf32> to vector<8xf32>
    %89 = vector.shape_cast %88 : vector<8xf32> to vector<8x1xf32>
    %90 = vector.broadcast %89 : vector<8x1xf32> to vector<8x128xf32>
    %91 = arith.subf %87, %90 : vector<8x128xf32>
    %92 = math.exp %91 : vector<8x128xf32>
    %cst_26 = arith.constant dense<0.000000e+00> : vector<8xf32>
    %93 = vector.multi_reduction <add>, %92, %cst_26 [1] : vector<8x128xf32> to vector<8xf32>
    %94 = vector.shape_cast %93 : vector<8xf32> to vector<8x1xf32>
    %95 = arith.addf %85, %89 : vector<8x1xf32>
    %96 = math.log %94 : vector<8x1xf32>
    %97 = arith.addf %95, %96 : vector<8x1xf32>
    %c5 = arith.constant 5 : index
    %c0_27 = arith.constant 0 : index
    %98 = vector.load %arg1[%c5, %c0_27] : memref<8x128xf32, #tpu.memory_space<vmem>>, vector<1x128xf32>
    %99 = vector.broadcast %97 : vector<8x1xf32> to vector<8x128xf32>
    %100 = arith.addf %99, %14 : vector<8x128xf32>
    %cst_28 = arith.constant dense<0xFF800000> : vector<128xf32>
    %101 = vector.multi_reduction <maximumf>, %100, %cst_28 [0] : vector<8x128xf32> to vector<128xf32>
    %102 = vector.shape_cast %101 : vector<128xf32> to vector<1x128xf32>
    %103 = vector.broadcast %102 : vector<1x128xf32> to vector<8x128xf32>
    %104 = arith.subf %100, %103 : vector<8x128xf32>
    %105 = math.exp %104 : vector<8x128xf32>
    %cst_29 = arith.constant dense<0.000000e+00> : vector<128xf32>
    %106 = vector.multi_reduction <add>, %105, %cst_29 [0] : vector<8x128xf32> to vector<128xf32>
    %107 = vector.shape_cast %106 : vector<128xf32> to vector<1x128xf32>
    %108 = arith.addf %98, %102 : vector<1x128xf32>
    %109 = math.log %107 : vector<1x128xf32>
    %110 = arith.addf %108, %109 : vector<1x128xf32>
    %c6 = arith.constant 6 : index
    %c0_30 = arith.constant 0 : index
    %111 = vector.load %arg1[%c6, %c0_30] : memref<8x128xf32, #tpu.memory_space<vmem>>, vector<1x128xf32>
    %cst_31 = arith.constant 0.000000e+00 : f32
    %112 = vector.shape_cast %111 : vector<1x128xf32> to vector<1x128xf32>
    %113 = vector.broadcast %112 : vector<1x128xf32> to vector<8x128xf32>
    %114 = vector.broadcast %cst_31 : f32 to vector<8x128xf32>
    %115 = arith.select %12, %113, %114 : vector<8x128xi1>, vector<8x128xf32>
    %cst_32 = arith.constant dense<0.000000e+00> : vector<8xf32>
    %116 = vector.multi_reduction <add>, %115, %cst_32 [1] : vector<8x128xf32> to vector<8xf32>
    %117 = vector.shape_cast %116 : vector<8xf32> to vector<8x1xf32>
    %118 = vector.broadcast %110 : vector<1x128xf32> to vector<8x128xf32>
    %119 = arith.addf %118, %13 : vector<8x128xf32>
    %cst_33 = arith.constant dense<0xFF800000> : vector<8xf32>
    %120 = vector.multi_reduction <maximumf>, %119, %cst_33 [1] : vector<8x128xf32> to vector<8xf32>
    %121 = vector.shape_cast %120 : vector<8xf32> to vector<8x1xf32>
    %122 = vector.broadcast %121 : vector<8x1xf32> to vector<8x128xf32>
    %123 = arith.subf %119, %122 : vector<8x128xf32>
    %124 = math.exp %123 : vector<8x128xf32>
    %cst_34 = arith.constant dense<0.000000e+00> : vector<8xf32>
    %125 = vector.multi_reduction <add>, %124, %cst_34 [1] : vector<8x128xf32> to vector<8xf32>
    %126 = vector.shape_cast %125 : vector<8xf32> to vector<8x1xf32>
    %127 = arith.addf %117, %121 : vector<8x1xf32>
    %128 = math.log %126 : vector<8x1xf32>
    %129 = arith.addf %127, %128 : vector<8x1xf32>
    %c7 = arith.constant 7 : index
    %c0_35 = arith.constant 0 : index
    %130 = vector.load %arg1[%c7, %c0_35] : memref<8x128xf32, #tpu.memory_space<vmem>>, vector<1x128xf32>
    %131 = vector.broadcast %129 : vector<8x1xf32> to vector<8x128xf32>
    %132 = arith.addf %131, %14 : vector<8x128xf32>
    %cst_36 = arith.constant dense<0xFF800000> : vector<128xf32>
    %133 = vector.multi_reduction <maximumf>, %132, %cst_36 [0] : vector<8x128xf32> to vector<128xf32>
    %134 = vector.shape_cast %133 : vector<128xf32> to vector<1x128xf32>
    %135 = vector.broadcast %134 : vector<1x128xf32> to vector<8x128xf32>
    %136 = arith.subf %132, %135 : vector<8x128xf32>
    %137 = math.exp %136 : vector<8x128xf32>
    %cst_37 = arith.constant dense<0.000000e+00> : vector<128xf32>
    %138 = vector.multi_reduction <add>, %137, %cst_37 [0] : vector<8x128xf32> to vector<128xf32>
    %139 = vector.shape_cast %138 : vector<128xf32> to vector<1x128xf32>
    %140 = arith.addf %130, %134 : vector<1x128xf32>
    %141 = math.log %139 : vector<1x128xf32>
    %142 = arith.addf %140, %141 : vector<1x128xf32>
    %c4_38 = arith.constant 4 : index
    %c0_39 = arith.constant 0 : index
    %143 = vector.load %arg2[%c4_38, %c0_39] : memref<8x128xf32, #tpu.memory_space<vmem>>, vector<1x128xf32>
    %144 = arith.addf %142, %143 : vector<1x128xf32>
    %cst_40 = arith.constant dense<0xFF800000> : vector<1xf32>
    %145 = vector.multi_reduction <maximumf>, %144, %cst_40 [1] : vector<1x128xf32> to vector<1xf32>
    %146 = vector.shape_cast %145 : vector<1xf32> to vector<1x1xf32>
    %147 = vector.broadcast %146 : vector<1x1xf32> to vector<1x128xf32>
    %148 = arith.subf %144, %147 : vector<1x128xf32>
    %149 = math.exp %148 : vector<1x128xf32>
    %cst_41 = arith.constant dense<0.000000e+00> : vector<1xf32>
    %150 = vector.multi_reduction <add>, %149, %cst_41 [1] : vector<1x128xf32> to vector<1xf32>
    %151 = vector.shape_cast %150 : vector<1xf32> to vector<1x1xf32>
    %152 = math.log %151 : vector<1x1xf32>
    %153 = arith.addf %146, %152 : vector<1x1xf32>
    %c0_42 = arith.constant 0 : index
    %c0_43 = arith.constant 0 : index
    %154 = vector.load %arg4[%c0_42, %c0_43] : memref<1x1xf32, #tpu.memory_space<vmem>>, vector<1x1xf32>
    tpu.vector_store %arg4[%c0_42, %c0_43], %153 {strides = array<i32>} : memref<1x1xf32, #tpu.memory_space<vmem>>, vector<1x1xf32>,
    return
  }
  func.func @transform_0(%arg0: i32) -> (i32, i32) {
    %c0_i32 = arith.constant 0 : i32
    %c0_i32_0 = arith.constant 0 : i32
    %c0_i32_1 = arith.constant 0 : i32
    return %c0_i32, %c0_i32_0 : i32, i32
  }
  func.func @transform_1(%arg0: i32) -> (i32, i32) {
    %c0_i32 = arith.constant 0 : i32
    %c0_i32_0 = arith.constant 0 : i32
    %c0_i32_1 = arith.constant 0 : i32
    return %c0_i32, %c0_i32_0 : i32, i32
  }
  func.func @transform_2(%arg0: i32) -> (i32, i32) {
    %c0_i32 = arith.constant 0 : i32
    %c0_i32_0 = arith.constant 0 : i32
    %c0_i32_1 = arith.constant 0 : i32
    return %c0_i32, %c0_i32_0 : i32, i32
  }
  func.func @transform_3(%arg0: i32) -> (i32, i32) {
    %c0_i32 = arith.constant 0 : i32
    %c0_i32_0 = arith.constant 0 : i32
    %c0_i32_1 = arith.constant 0 : i32
    return %c0_i32, %c0_i32_0 : i32, i32
  }
}

</mosaic_0001>

<llo_original>
// kernel: tpu_custom_call.1
$region0: #{tpu_custom_call.1}
  #allocation0 [shape = 'u32[]', space=smem, size = 0x4, offset = 0x4, fixed_abs, tag = 'smem constant byte address 0x4 - core index']
  #allocation1 [shape = 'u32[144,128]{1,0:T(1,128)}', space=vmem, size = 0x12000, scoped, tag = 'internal scratch']
  %s0 = inlined_call_operand.hbm [shape: f32[8,128], index: 0, kind: input, shape index: {}]
  %s1 = inlined_call_operand.hbm [shape: f32[8,128], index: 1, kind: input, shape index: {}]
  %s2 = inlined_call_operand.hbm [shape: f32[8,128], index: 2, kind: input, shape index: {}]
  %s3 = inlined_call_operand.hbm [shape: f32[1,1], index: 3, kind: output, shape index: {}]
  %s4 = sld [smem:[#allocation0]]
  $region34: #{tpu_custom_call.1} parent=0
    _
  %s6 = ssub.s32 1, %s4
  %s7 = scalar_select 0, %s6, %s4
  $region1: #{tpu_custom_call.1} parent=0
    #allocation2 [shape = 'u8[4096]{0}', space=vmem, size = 0x1000, scoped, tag = 'input window, operand 0, single buffered']
    #allocation3 [shape = 's32[1]{0}', space=sflag, size = 0x4, scoped, tag = 'scoped memory for tpu_custom_call.1']
    #allocation4 [shape = 's32[1]{0}', space=sflag, size = 0x4, scoped, tag = 'scoped memory for tpu_custom_call.1']
    #allocation5 [shape = 'u8[4096]{0}', space=vmem, size = 0x1000, scoped, tag = 'input window, operand 1, single buffered']
    #allocation6 [shape = 's32[1]{0}', space=sflag, size = 0x4, scoped, tag = 'scoped memory for tpu_custom_call.1']
    #allocation7 [shape = 'u8[4096]{0}', space=vmem, size = 0x1000, scoped, tag = 'input window, operand 2, single buffered']
    #allocation8 [shape = 'u8[512]{0}', space=vmem, size = 0x400, scoped, tag = 'output window, operand 0, single buffered']
    %8 = vsyncpa [#allocation3], 0
    %9 = vsyncpa [#allocation6], 0
    %10 = vsyncpa [#allocation4], 0
    // Predicated region
    $region2: #{tpu_custom_call.1} parent=1 // pred_check
      _
    $region3: #{tpu_custom_call.1} parent=1 // pred_check_branch
      %12 = sbr.rel (0) target = $region5
    $region4: #{tpu_custom_call.1} parent=1 // pred_region
      %s14 = ssub.s32 128, 128
      %15 = vsyncadd [#allocation3], %s14
      %s17 = sshll.u32 [#allocation2], 4
      %s18 = int_to_ptr.vmem [resolvable:$true] %s17
      %20 = dma.hbm_to_vmem [thread:$0]  %s0, 128, %s18, [#allocation3]
    $region5: #{tpu_custom_call.1} parent=1 // pred_fallthru
      _
    // Predicated region
    $region6: #{tpu_custom_call.1} parent=1 // pred_check
      _
    $region7: #{tpu_custom_call.1} parent=1 // pred_check_branch
      %22 = sbr.rel (0) target = $region9
    $region8: #{tpu_custom_call.1} parent=1 // pred_region
      %s24 = ssub.s32 128, 128
      %25 = vsyncadd [#allocation6], %s24
      %s27 = sshll.u32 [#allocation5], 4
      %s28 = int_to_ptr.vmem [resolvable:$true] %s27
      %30 = dma.hbm_to_vmem [thread:$0]  %s1, 128, %s28, [#allocation6]
    $region9: #{tpu_custom_call.1} parent=1 // pred_fallthru
      _
    // Predicated region
    $region10: #{tpu_custom_call.1} parent=1 // pred_check
      _
    $region11: #{tpu_custom_call.1} parent=1 // pred_check_branch
      %32 = sbr.rel (0) target = $region13
    $region12: #{tpu_custom_call.1} parent=1 // pred_region
      %s34 = ssub.s32 128, 128
      %35 = vsyncadd [#allocation6], %s34
      %s37 = sshll.u32 [#allocation7], 4
      %s38 = int_to_ptr.vmem [resolvable:$true] %s37
      %40 = dma.hbm_to_vmem [thread:$0]  %s2, 128, %s38, [#allocation6]
    $region13: #{tpu_custom_call.1} parent=1 // pred_fallthru
      _
    // Predicated region
    $region14: #{tpu_custom_call.1} parent=1 // pred_check
      _
    $region15: #{tpu_custom_call.1} parent=1 // pred_check_branch
      %42 = sbr.rel (0) target = $region17
    $region16: #{tpu_custom_call.1} parent=1 // pred_region
      %43 = dma.done [#allocation3], 128
    $region17: #{tpu_custom_call.1} parent=1 // pred_fallthru
      _
    // Predicated region
    $region18: #{tpu_custom_call.1} parent=1 // pred_check
      _
    $region19: #{tpu_custom_call.1} parent=1 // pred_check_branch
      %45 = sbr.rel (0) target = $region21
    $region20: #{tpu_custom_call.1} parent=1 // pred_region
      %46 = dma.done [#allocation6], 128
    $region21: #{tpu_custom_call.1} parent=1 // pred_fallthru
      _
    // Predicated region
    $region22: #{tpu_custom_call.1} parent=1 // pred_check
      _
    $region23: #{tpu_custom_call.1} parent=1 // pred_check_branch
      %48 = sbr.rel (0) target = $region25
    $region24: #{tpu_custom_call.1} parent=1 // pred_region
      %49 = dma.done [#allocation6], 128
    $region25: #{tpu_custom_call.1} parent=1 // pred_fallthru
      _
    %v50 = vlaneseq
    %v51 = vand.u32 %v50, 127
    %vm52 = vcmp.eq.s32.totalorder %v51, 3
    %v53 = vsel %vm52, 0.0, -10000.0
    %vm54 = vcmp.lt.s32.totalorder %v51, 5
    %v55 = vsel %vm54, %v53, -1e+30
    %v56 = vlaneseq
    %v57 = vshrl.u32 %v56, 7
    %vm58 = vcmp.eq.s32.totalorder %v57, %v51
    %v59 = vld [vmem:[#allocation5] sm:$0xff]
    %v60 = vld [vmem:[#allocation7] sm:$0xff]
    %v61 = vld [vmem:[#allocation2] sm:$0x1]
    %v62 = vlaneseq
    %v63 = vshrl.u32 %v62, 7
    %v64 = vsub.s32 0, %v63
    %v65 = vrot.slane %v61, %v64
    %v66 = vsel %vm58, %v65, 0.0
    %67 = vadd.xlane.f32.xlu0 %v66
    %v68 = vpop.xlane.xlu0 %67
    %v69 = vadd.f32 %v55, %v59
    %70 = vmax.xlane.f32.xlu0 %v69
    %v71 = vpop.xlane.xlu0 %70
    %v72 = vsub.f32 %v69, %v71
    %v73 = vmul.f32 %v72, 1.442695
    %v74 = vpow.pop %v73
    %75 = vadd.xlane.f32.xlu0 %v74
    %v76 = vpop.xlane.xlu0 %75
    %v77 = vadd.f32 %v68, %v71
    %v78 = vlog2.pop %v76
    %v79 = vmul.f32 %v78, 0.6931472
    %v80 = vadd.f32 %v77, %v79
    %v81 = vld [vmem:[#allocation2 + $0x1] sm:$0x1]
    %v82 = vadd.f32 %v80, %v60
    %v83 = vrot.slane %v82, 4
    %v84 = vmax.f32 %v82, %v83
    %v85 = vrot.slane %v84, 2
    %v86 = vmax.f32 %v84, %v85
    %v87 = vrot.slane %v86, 1
    %v88 = vmax.f32 %v86, %v87
    %v89 = vsub.f32 %v82, %v88
    %v90 = vmul.f32 %v89, 1.442695
    %v91 = vpow.pop %v90
    %v92 = vrot.slane %v91, 4
    %v93 = vadd.f32 %v91, %v92
    %v94 = vrot.slane %v93, 2
    %v95 = vadd.f32 %v93, %v94
    %v96 = vrot.slane %v95, 1
    %v97 = vadd.f32 %v95, %v96
    %v98 = vadd.f32 %v81, %v88
    %v99 = vlog2.pop %v97
    %v100 = vmul.f32 %v99, 0.6931472
    %v101 = vadd.f32 %v98, %v100
    %v102 = vld [vmem:[#allocation2 + $0x2] sm:$0x1]
    %v103 = vlaneseq
    %v104 = vshrl.u32 %v103, 7
    %v105 = vsub.s32 0, %v104
    %v106 = vrot.slane %v102, %v105
    %v107 = vsel %vm58, %v106, 0.0
    %108 = vadd.xlane.f32.xlu0 %v107
    %v109 = vpop.xlane.xlu0 %108
    %v110 = vlaneseq
    %v111 = vshrl.u32 %v110, 7
    %v112 = vsub.s32 0, %v111
    %v113 = vrot.slane %v101, %v112
    %v114 = vadd.f32 %v113, %v59
    %115 = vmax.xlane.f32.xlu0 %v114
    %v116 = vpop.xlane.xlu0 %115
    %v117 = vsub.f32 %v114, %v116
    %v118 = vmul.f32 %v117, 1.442695
    %v119 = vpow.pop %v118
    %120 = vadd.xlane.f32.xlu0 %v119
    %v121 = vpop.xlane.xlu0 %120
    %v122 = vadd.f32 %v109, %v116
    %v123 = vlog2.pop %v121
    %v124 = vmul.f32 %v123, 0.6931472
    %v125 = vadd.f32 %v122, %v124
    %v126 = vld [vmem:[#allocation2 + $0x3] sm:$0x1]
    %v127 = vadd.f32 %v125, %v60
    %v128 = vrot.slane %v127, 4
    %v129 = vmax.f32 %v127, %v128
    %v130 = vrot.slane %v129, 2
    %v131 = vmax.f32 %v129, %v130
    %v132 = vrot.slane %v131, 1
    %v133 = vmax.f32 %v131, %v132
    %v134 = vsub.f32 %v127, %v133
    %v135 = vmul.f32 %v134, 1.442695
    %v136 = vpow.pop %v135
    %v137 = vrot.slane %v136, 4
    %v138 = vadd.f32 %v136, %v137
    %v139 = vrot.slane %v138, 2
    %v140 = vadd.f32 %v138, %v139
    %v141 = vrot.slane %v140, 1
    %v142 = vadd.f32 %v140, %v141
    %v143 = vadd.f32 %v126, %v133
    %v144 = vlog2.pop %v142
    %v145 = vmul.f32 %v144, 0.6931472
    %v146 = vadd.f32 %v143, %v145
    %v147 = vld [vmem:[#allocation2 + $0x4] sm:$0x1]
    %v148 = vlaneseq
    %v149 = vshrl.u32 %v148, 7
    %v150 = vsub.s32 0, %v149
    %v151 = vrot.slane %v147, %v150
    %v152 = vsel %vm58, %v151, 0.0
    %153 = vadd.xlane.f32.xlu0 %v152
    %v154 = vpop.xlane.xlu0 %153
    %v155 = vlaneseq
    %v156 = vshrl.u32 %v155, 7
    %v157 = vsub.s32 0, %v156
    %v158 = vrot.slane %v146, %v157
    %v159 = vadd.f32 %v158, %v59
    %160 = vmax.xlane.f32.xlu0 %v159
    %v161 = vpop.xlane.xlu0 %160
    %v162 = vsub.f32 %v159, %v161
    %v163 = vmul.f32 %v162, 1.442695
    %v164 = vpow.pop %v163
    %165 = vadd.xlane.f32.xlu0 %v164
    %v166 = vpop.xlane.xlu0 %165
    %v167 = vadd.f32 %v154, %v161
    %v168 = vlog2.pop %v166
    %v169 = vmul.f32 %v168, 0.6931472
    %v170 = vadd.f32 %v167, %v169
    %v171 = vld [vmem:[#allocation2 + $0x5] sm:$0x1]
    %v172 = vadd.f32 %v170, %v60
    %v173 = vrot.slane %v172, 4
    %v174 = vmax.f32 %v172, %v173
    %v175 = vrot.slane %v174, 2
    %v176 = vmax.f32 %v174, %v175
    %v177 = vrot.slane %v176, 1
    %v178 = vmax.f32 %v176, %v177
    %v179 = vsub.f32 %v172, %v178
    %v180 = vmul.f32 %v179, 1.442695
    %v181 = vpow.pop %v180
    %v182 = vrot.slane %v181, 4
    %v183 = vadd.f32 %v181, %v182
    %v184 = vrot.slane %v183, 2
    %v185 = vadd.f32 %v183, %v184
    %v186 = vrot.slane %v185, 1
    %v187 = vadd.f32 %v185, %v186
    %v188 = vadd.f32 %v171, %v178
    %v189 = vlog2.pop %v187
    %v190 = vmul.f32 %v189, 0.6931472
    %v191 = vadd.f32 %v188, %v190
    %v192 = vld [vmem:[#allocation2 + $0x6] sm:$0x1]
    %v193 = vlaneseq
    %v194 = vshrl.u32 %v193, 7
    %v195 = vsub.s32 0, %v194
    %v196 = vrot.slane %v192, %v195
    %v197 = vsel %vm58, %v196, 0.0
    %198 = vadd.xlane.f32.xlu0 %v197
    %v199 = vpop.xlane.xlu0 %198
    %v200 = vlaneseq
    %v201 = vshrl.u32 %v200, 7
    %v202 = vsub.s32 0, %v201
    %v203 = vrot.slane %v191, %v202
    %v204 = vadd.f32 %v203, %v59
    %205 = vmax.xlane.f32.xlu0 %v204
    %v206 = vpop.xlane.xlu0 %205
    %v207 = vsub.f32 %v204, %v206
    %v208 = vmul.f32 %v207, 1.442695
    %v209 = vpow.pop %v208
    %210 = vadd.xlane.f32.xlu0 %v209
    %v211 = vpop.xlane.xlu0 %210
    %v212 = vadd.f32 %v199, %v206
    %v213 = vlog2.pop %v211
    %v214 = vmul.f32 %v213, 0.6931472
    %v215 = vadd.f32 %v212, %v214
    %v216 = vld [vmem:[#allocation2 + $0x7] sm:$0x1]
    %v217 = vadd.f32 %v215, %v60
    %v218 = vrot.slane %v217, 4
    %v219 = vmax.f32 %v217, %v218
    %v220 = vrot.slane %v219, 2
    %v221 = vmax.f32 %v219, %v220
    %v222 = vrot.slane %v221, 1
    %v223 = vmax.f32 %v221, %v222
    %v224 = vsub.f32 %v217, %v223
    %v225 = vmul.f32 %v224, 1.442695
    %v226 = vpow.pop %v225
    %v227 = vrot.slane %v226, 4
    %v228 = vadd.f32 %v226, %v227
    %v229 = vrot.slane %v228, 2
    %v230 = vadd.f32 %v228, %v229
    %v231 = vrot.slane %v230, 1
    %v232 = vadd.f32 %v230, %v231
    %v233 = vadd.f32 %v216, %v223
    %v234 = vlog2.pop %v232
    %v235 = vmul.f32 %v234, 0.6931472
    %v236 = vadd.f32 %v233, %v235
    %v237 = vld [vmem:[#allocation5 + $0x4] sm:$0x1]
    %v238 = vadd.f32 %v236, %v237
    %vm239 = vcmask 1040384
    %v240 = vsel %vm239, %v238, -inf
    %241 = vmax.xlane.f32.xlu0 %v240
    %v242 = vpop.xlane.xlu0 %241
    %v243 = vsub.f32 %v238, %v242
    %v244 = vmul.f32 %v243, 1.442695
    %v245 = vpow.pop %v244
    %v246 = vsel %vm239, %v245, 0.0
    %247 = vadd.xlane.f32.xlu0 %v246
    %v248 = vpop.xlane.xlu0 %247
    %v249 = vlog2.pop %v248
    %v250 = vmul.f32 %v249, 0.6931472
    %v251 = vadd.f32 %v242, %v250
    %vm252 = vcmask 0
    %253 = vst.msk [vmem:[#allocation8] sm:$0x1] %vm252, %v251
    // Predicated region
    $region26: #{tpu_custom_call.1} parent=1 // pred_check
      _
    $region27: #{tpu_custom_call.1} parent=1 // pred_check_branch
      %255 = sbr.rel (0) target = $region29
    $region28: #{tpu_custom_call.1} parent=1 // pred_region
      %s257 = ssub.s32 16, 16
      %258 = vsyncadd [#allocation4], %s257
      %s260 = sshll.u32 [#allocation8], 4
      %s261 = int_to_ptr.vmem [resolvable:$true] %s260
      %263 = dma.vmem_to_hbm [thread:$0]  %s261, 16, %s3, [#allocation4]
    $region29: #{tpu_custom_call.1} parent=1 // pred_fallthru
      _
    // Predicated region
    $region30: #{tpu_custom_call.1} parent=1 // pred_check
      _
    $region31: #{tpu_custom_call.1} parent=1 // pred_check_branch
      %265 = sbr.rel (0) target = $region33
    $region32: #{tpu_custom_call.1} parent=1 // pred_region
      %266 = dma.done [#allocation4], 16
    $region33: #{tpu_custom_call.1} parent=1 // pred_fallthru
      _
    %267 = vsyncpa [#allocation3], 1
    %268 = vsyncpa [#allocation6], 1
    %269 = vsyncpa [#allocation4], 1

</llo_original>
